<compile_context>
chip_gen: v7x
topology: tpu7x:2x2x1
jax: 0.10.0
libtpu: 0.0.40
codegen_flags: <defaults>
</compile_context>

<pallas_src>
import functools

import jax
import jax.numpy as jnp
from jax.experimental import pallas as pl
from jax.experimental.pallas import tpu as pltpu


def _sublayer_connection_kernel(x_ref, w_ref, b_ref, o_ref, *,
                                hidden, eps, rows, tile_rows, mask_tail):
    x = x_ref[...].astype(jnp.float32)                        # (tile_rows, H)

    if mask_tail:
        # Ragged last block: zero out-of-range rows so stale-VMEM garbage
        # never enters the math (their stores are clipped by the pipeline).
        row0 = pl.program_id(0) * tile_rows
        row_ids = row0 + jax.lax.broadcasted_iota(jnp.int32, (tile_rows, 1), 0)
        x = jnp.where(row_ids < rows, x, 0.0)

    # --- LayerNorm core (torch semantics: unbiased std, divide by std+eps) ---
    mean = jnp.mean(x, axis=-1, keepdims=True)                # (tile_rows, 1)
    centered = x - mean
    var_unbiased = (jnp.sum(centered * centered, axis=-1, keepdims=True)
                    / (hidden - 1))
    std = jnp.sqrt(var_unbiased)
    # Exact reciprocal keeps the 1e-4 check vs. the f32 reference.
    inv = pl.reciprocal(std + eps, approx=False)              # (tile_rows, 1)
    y = centered * inv    # LayerNorm gain/shift are folded into w_ref / b_ref

    # --- sublayer: Linear(H, H) on the MXU (affine-folded weight/bias) ---
    z = jnp.dot(y, w_ref[...], preferred_element_type=jnp.float32) + b_ref[...]

    # --- dropout (eval mode: identity) + residual ---
    o_ref[...] = (x + z).astype(o_ref.dtype)


def _fold_layernorm_affine(w, b, a2, b2):
    """Fold LayerNorm's (a_2, b_2) into the Linear (exact algebra):

      (a2*(c*inv) + b2) @ W + b  ==  (c*inv) @ (a2[:,None]*W) + (b2 @ W + b)
    """
    w_f32 = w.astype(jnp.float32)
    w_fold = a2.astype(jnp.float32)[:, None] * w_f32          # (H, H)
    b_fold = b2.astype(jnp.float32) @ w_f32 + b.astype(jnp.float32)   # (H,)
    return w_fold, b_fold


def sublayer_connection(x, w, b, a2, b2, *, eps=1e-6, tile_rows=1024):
    """x: [B, S, H]; w: [H, H]; b, a2, b2: [H]."""
    B, S, H = x.shape
    rows = B * S
    dtype = x.dtype

    x2d = x.reshape(rows, H)                       # H -> lane axis
    w_fold, b_fold = _fold_layernorm_affine(w, b, a2, b2)
    b_fold2d = b_fold.reshape(1, H)

    # Balanced row tiling: number of tiles first, then a multiple-of-8 tile
    # that minimizes ragged waste.  Force >= 2 tiles when rows allow so the
    # ("parallel",) grid can use both TensorCores (v7x megacore).
    nt = pl.cdiv(rows, int(tile_rows))
    if rows >= 16:
        nt = max(nt, 2)
    tr = ((pl.cdiv(rows, nt) + 7) // 8) * 8        # sublane multiple of 8
    n_tiles = pl.cdiv(rows, tr)
    mask_tail = (rows % tr) != 0

    dsize = jnp.dtype(dtype).itemsize
    vmem_bytes = (2 * tr * H * dsize               # x tiles (double-buffered)
                  + 2 * tr * H * dsize             # out tiles (double-buffered)
                  + 2 * H * H * 4                  # resident f32 weight
                  + 2 * H * 4)                     # folded bias
    vmem_limit = int(min(100 * 2**20, max(2 * vmem_bytes, 32 * 2**20)))

    cost = pl.CostEstimate(
        flops=2 * rows * H * H,
        transcendentals=rows,
        bytes_accessed=2 * rows * H * dsize + H * H * 4 + H * 4,
    )

    kernel = functools.partial(
        _sublayer_connection_kernel,
        hidden=H, eps=eps, rows=rows, tile_rows=tr, mask_tail=mask_tail)

    out2d = pl.pallas_call(
        kernel,
        out_shape=jax.ShapeDtypeStruct((rows, H), dtype),
        grid_spec=pltpu.PrefetchScalarGridSpec(
            num_scalar_prefetch=0,
            grid=(n_tiles,),
            in_specs=[
                pl.BlockSpec((tr, H), lambda i: (i, 0)),   # x row tile
                pl.BlockSpec((H, H), lambda i: (0, 0)),    # folded weight (resident)
                pl.BlockSpec((1, H), lambda i: (0, 0)),    # folded bias
            ],
            out_specs=pl.BlockSpec((tr, H), lambda i: (i, 0)),
        ),
        compiler_params=pltpu.CompilerParams(
            dimension_semantics=("parallel",),
            vmem_limit_bytes=vmem_limit),
        cost_estimate=cost,
    )(x2d, w_fold, b_fold2d)

    return out2d.reshape(B, S, H)


def reference(x, w, b, a2, b2, eps=1e-6):
    """Literal (unfolded) PyTorch-module math in f32."""
    xf = x.astype(jnp.float32)
    mean = jnp.mean(xf, axis=-1, keepdims=True)
    centered = xf - mean
    var = jnp.sum(centered * centered, axis=-1, keepdims=True) / (x.shape[-1] - 1)
    std = jnp.sqrt(var)
    y = a2 * centered / (std + eps) + b2
    z = y @ w.astype(jnp.float32) + b
    return (xf + z).astype(x.dtype)


def reference_folded(x, w, b, a2, b2, eps=1e-6):
    """Same math with the affine folded (identical matmul operands as the
    kernel, so it tracks the kernel to ~1e-4 under default matmul precision)."""
    w_fold, b_fold = _fold_layernorm_affine(w, b, a2, b2)
    xf = x.astype(jnp.float32)
    mean = jnp.mean(xf, axis=-1, keepdims=True)
    centered = xf - mean
    var = jnp.sum(centered * centered, axis=-1, keepdims=True) / (x.shape[-1] - 1)
    std = jnp.sqrt(var)
    y = centered / (std + eps)
    z = jnp.dot(y, w_fold) + b_fold
    return (xf + z).astype(x.dtype)


if __name__ == "__main__":
    H = 128
    key = jax.random.PRNGKey(0)
    kx, kw, kb, ka, kb2, kx2 = jax.random.split(key, 6)

    # Sublayer Linear(H, H): small deterministic random parameters.
    w = jax.random.normal(kw, (H, H), dtype=jnp.float32) * 0.02
    b = jax.random.normal(kb, (H,), dtype=jnp.float32) * 0.02

    # --- Test 1: module-default LayerNorm params (a_2=1, b_2=0), small shape ---
    B, S = 2, 8
    x = jax.random.normal(kx, (B, S, H), dtype=jnp.float32)
    a2 = jnp.ones((H,), dtype=jnp.float32)
    b2 = jnp.zeros((H,), dtype=jnp.float32)

    out = jax.block_until_ready(sublayer_connection(x, w, b, a2, b2))
    ref = reference(x, w, b, a2, b2)
    assert out.shape == (B, S, H)
    assert jnp.allclose(out, ref, atol=1e-4, rtol=1e-4), "mismatch vs reference"

    # --- Test 2: non-trivial affine + ragged row count (600 rows, no wrapper
    # padding: grid of 2 x 304-row tiles, last block masked in-kernel) ---
    B2, S2 = 3, 200
    x_big = jax.random.normal(kx2, (B2, S2, H), dtype=jnp.float32)
    a2n = 1.0 + 0.1 * jax.random.normal(ka, (H,), dtype=jnp.float32)
    b2n = 0.1 * jax.random.normal(kb2, (H,), dtype=jnp.float32)

    out_big = jax.block_until_ready(sublayer_connection(x_big, w, b, a2n, b2n))
    assert out_big.shape == (B2, S2, H)

    # Tight check against the folded reference (same matmul operands).
    ref_big_folded = reference_folded(x_big, w, b, a2n, b2n)
    assert jnp.allclose(out_big, ref_big_folded, atol=1e-4, rtol=1e-4), \
        "mismatch vs folded reference (big)"
    # Looser cross-check against the literal module math: remaining difference
    # is only bf16 operand rounding of the default-precision TPU matmul applied
    # to folded vs. unfolded operands (exact algebra otherwise).
    ref_big = reference(x_big, w, b, a2n, b2n)
    assert jnp.allclose(out_big, ref_big, atol=1e-2, rtol=1e-2), \
        "mismatch vs literal reference (big)"

    print("KERNEL_OK")
</pallas_src>

<mosaic_0001>
module attributes {stable_mosaic.version = 11 : i64} {
  func.func @_sublayer_connection_kernel(%arg0: i32, %arg1: memref<8x128xf32, #tpu.memory_space<vmem>>, %arg2: memref<128x128xf32, #tpu.memory_space<vmem>>, %arg3: memref<1x128xf32, #tpu.memory_space<vmem>>, %arg4: memref<8x128xf32, #tpu.memory_space<vmem>>) attributes {dimension_semantics = [#tpu.dimension_semantics<parallel>], iteration_bounds = array<i64: 2>, scalar_prefetch = 0 : i64, scratch_operands = 0 : i64, tpu.core_type = #tpu.core_type<tc>, window_params = [{transform_indices = @transform_0, window_bounds = array<i64: 8, 128>}, {pipeline_mode = #tpu.pipeline_mode<synchronous>, transform_indices = @transform_1, window_bounds = array<i64: 128, 128>}, {pipeline_mode = #tpu.pipeline_mode<synchronous>, transform_indices = @transform_2, window_bounds = array<i64: 1, 128>}, {transform_indices = @transform_3, window_bounds = array<i64: 8, 128>}]} {
    %c0 = arith.constant 0 : index
    %c0_0 = arith.constant 0 : index
    %0 = vector.load %arg1[%c0, %c0_0] : memref<8x128xf32, #tpu.memory_space<vmem>>, vector<8x128xf32>
    %cst = arith.constant dense<0.000000e+00> : vector<8xf32>
    %1 = vector.multi_reduction <add>, %0, %cst [1] : vector<8x128xf32> to vector<8xf32>
    %2 = vector.shape_cast %1 : vector<8xf32> to vector<8x1xf32>
    %cst_1 = arith.constant 1.280000e+02 : f32
    %3 = vector.broadcast %cst_1 : f32 to vector<8x1xf32>
    %4 = arith.divf %2, %3 : vector<8x1xf32>
    %5 = vector.broadcast %4 : vector<8x1xf32> to vector<8x128xf32>
    %6 = arith.subf %0, %5 : vector<8x128xf32>
    %7 = arith.mulf %6, %6 : vector<8x128xf32>
    %cst_2 = arith.constant dense<0.000000e+00> : vector<8xf32>
    %8 = vector.multi_reduction <add>, %7, %cst_2 [1] : vector<8x128xf32> to vector<8xf32>
    %9 = vector.shape_cast %8 : vector<8xf32> to vector<8x1xf32>
    %cst_3 = arith.constant 1.270000e+02 : f32
    %10 = vector.broadcast %cst_3 : f32 to vector<8x1xf32>
    %11 = arith.divf %9, %10 : vector<8x1xf32>
    %12 = math.sqrt %11 : vector<8x1xf32>
    %cst_4 = arith.constant 9.99999997E-7 : f32
    %13 = vector.broadcast %cst_4 : f32 to vector<8x1xf32>
    %14 = arith.addf %12, %13 : vector<8x1xf32>
    %15 = tpu.reciprocal %14 : vector<8x1xf32> -> vector<8x1xf32>
    %16 = vector.broadcast %15 : vector<8x1xf32> to vector<8x128xf32>
    %17 = arith.mulf %6, %16 : vector<8x128xf32>
    %c0_5 = arith.constant 0 : index
    %c0_6 = arith.constant 0 : index
    %18 = vector.load %arg2[%c0_5, %c0_6] : memref<128x128xf32, #tpu.memory_space<vmem>>, vector<128x128xf32>
    %cst_7 = arith.constant dense<0.000000e+00> : vector<8x128xf32>
    %19 = tpu.matmul %17, %18, %cst_7 {dimension_numbers = #tpu.dot_dimension_numbers<[1], [0], [0], [1], [0, 0, 1, 1], [], []>} : vector<8x128xf32>, vector<128x128xf32>, vector<8x128xf32> -> vector<8x128xf32>
    %c0_8 = arith.constant 0 : index
    %c0_9 = arith.constant 0 : index
    %20 = vector.load %arg3[%c0_8, %c0_9] : memref<1x128xf32, #tpu.memory_space<vmem>>, vector<1x128xf32>
    %21 = vector.broadcast %20 : vector<1x128xf32> to vector<8x128xf32>
    %22 = arith.addf %19, %21 : vector<8x128xf32>
    %23 = arith.addf %0, %22 : vector<8x128xf32>
    %c0_10 = arith.constant 0 : index
    %c0_11 = arith.constant 0 : index
    %24 = vector.load %arg4[%c0_10, %c0_11] : memref<8x128xf32, #tpu.memory_space<vmem>>, vector<8x128xf32>
    tpu.vector_store %arg4[%c0_10, %c0_11], %23 {strides = array<i32>} : memref<8x128xf32, #tpu.memory_space<vmem>>, vector<8x128xf32>,
    return
  }
  func.func @transform_0(%arg0: i32) -> (i32, i32) {
    %c0_i32 = arith.constant 0 : i32
    %c0_i32_0 = arith.constant 0 : i32
    return %arg0, %c0_i32 : i32, i32
  }
  func.func @transform_1(%arg0: i32) -> (i32, i32) {
    %c0_i32 = arith.constant 0 : i32
    %c0_i32_0 = arith.constant 0 : i32
    %c0_i32_1 = arith.constant 0 : i32
    return %c0_i32, %c0_i32_0 : i32, i32
  }
  func.func @transform_2(%arg0: i32) -> (i32, i32) {
    %c0_i32 = arith.constant 0 : i32
    %c0_i32_0 = arith.constant 0 : i32
    %c0_i32_1 = arith.constant 0 : i32
    return %c0_i32, %c0_i32_0 : i32, i32
  }
  func.func @transform_3(%arg0: i32) -> (i32, i32) {
    %c0_i32 = arith.constant 0 : i32
    %c0_i32_0 = arith.constant 0 : i32
    return %arg0, %c0_i32 : i32, i32
  }
}

</mosaic_0001>

<llo_original>
// kernel: tpu_custom_call.1
$region0: #{tpu_custom_call.1}
  #allocation0 [shape = 'u32[]', space=smem, size = 0x4, offset = 0x4, fixed_abs, tag = 'smem constant byte address 0x4 - core index']
  #allocation1 [shape = 'u32[144,128]{1,0:T(1,128)}', space=vmem, size = 0x12000, scoped, tag = 'internal scratch']
  %s0 = inlined_call_operand.hbm [shape: f32[16,128], index: 0, kind: input, shape index: {}]
  %s1 = inlined_call_operand.hbm [shape: f32[128,128], index: 1, kind: input, shape index: {}]
  %s2 = inlined_call_operand.vmem [shape: f32[1,128], index: 2, kind: input, shape index: {}]
  %s3 = inlined_call_operand.hbm [shape: f32[16,128], index: 3, kind: output, shape index: {}]
  %s4 = sld [smem:[#allocation0]]
  $region53: #{tpu_custom_call.1} parent=0
    _
  %s6 = ssub.s32 1, %s4
  %s7 = scalar_select 0, %s6, %s4
  $region1: #{tpu_custom_call.1} parent=0
    #allocation2 [shape = 'u8[8192]{0}', space=vmem, size = 0x2000, scoped, tag = 'input window, operand 0']
    #allocation3 [shape = 's32[2]{0}', space=sflag, size = 0x8, scoped, tag = 'scoped memory for tpu_custom_call.1']
    #allocation4 [shape = 's32[2]{0}', space=sflag, size = 0x8, scoped, tag = 'scoped memory for tpu_custom_call.1']
    #allocation5 [shape = 'u8[65536]{0}', space=vmem, size = 0x10000, scoped, tag = 'input window, operand 1, single buffered']
    #allocation6 [shape = 's32[1]{0}', space=sflag, size = 0x4, scoped, tag = 'scoped memory for tpu_custom_call.1']
    #allocation7 [shape = 'u8[8192]{0}', space=vmem, size = 0x2000, scoped, tag = 'output window, operand 0']
    %8 = vsyncpa [#allocation3], 0
    %s9 = scalar_lea.sflag [#allocation3], 1
    %10 = vsyncpa %s9, 0
    %11 = vsyncpa [#allocation6], 0
    %12 = vsyncpa [#allocation4], 0
    %s13 = scalar_lea.sflag [#allocation4], 1
    %14 = vsyncpa %s13, 0
    loop: start=0, step=1, limit=4
    $region2: #{tpu_custom_call.1} parent=1 // loop_pre_header
      _
    $region3: #{tpu_custom_call.1} parent=1 // loop_header
      %s16 = sphi 0, %s20
      %p17 = scmp.ge.s32.totalorder %s16, 4
      %s26 = sphi 0, %s28
      %s29 = sphi 0, %s26
      %s30 = sphi 0, %s29
      %s46 = sphi 0, %s30
      %s50 = sphi 0, %s50
      %s52 = sphi 0, %s50
      %s53 = sphi 0, %s52
      %s67 = sphi 0, %s53
      %s71 = sphi 0, %s71
      %s73 = sphi 0, %s71
      %s74 = sphi 0, %s73
      %s88 = sphi 0, %s74
      %s94 = sphi 0, %s96
      %s97 = sphi 0, %s94
      %s98 = sphi 0, %s97
      %s114 = sphi 0, %s98
    $region4: #{tpu_custom_call.1} parent=1 // loop_header_branch
      %19 = sbr.rel (%p17) target = $region8
    $region5: #{tpu_custom_call.1} parent=1 // loop_body
      %s21 = ssub.s32 %s16, 1
      %s22 = ssub.s32 %s16, 2
      %s23 = sadd.s32 %s16, 1
      %s24 = ssub.s32 %s16, %s23
      %p25 = scmp.eq.s32.totalorder %s24, 0
      %s27 = sadd.s32 %s26, 1
      %s28 = scalar_select %p25, %s26, %s27
      %p31 = pneg %p25
      %p32 = scmp.eq.s32.totalorder %s16, 1
      %p33 = por %p31, %p32
      %p34 = scmp.ne.s32.totalorder %s26, %s29
      %p35 = scmp.eq.s32.totalorder %s16, 0
      %p36 = por %p34, %p35
      %p37 = scmp.ne.s32.totalorder %s26, %s29
      %p38 = scmp.eq.s32.totalorder %s21, 1
      %p39 = por %p37, %p38
      %p40 = scmp.ne.s32.totalorder %s29, %s30
      %p41 = scmp.eq.s32.totalorder %s21, 0
      %p42 = por %p40, %p41
      %p43 = scmp.ne.s32.totalorder %s29, %s30
      %p44 = scmp.eq.s32.totalorder %s22, 1
      %p45 = por %p43, %p44
      %p47 = scmp.ne.s32.totalorder %s30, %s46
      %p48 = scmp.eq.s32.totalorder %s22, 0
      %p49 = por %p47, %p48
      %s51 = sadd.s32 %s50, 1
      %p54 = scmp.eq.s32.totalorder %s16, 1
      %p55 = scmp.ne.s32.totalorder %s50, %s52
      %p56 = scmp.eq.s32.totalorder %s16, 0
      %p57 = por %p55, %p56
      %p58 = scmp.ne.s32.totalorder %s50, %s52
      %p59 = scmp.eq.s32.totalorder %s21, 1
      %p60 = por %p58, %p59
      %p61 = scmp.ne.s32.totalorder %s52, %s53
      %p62 = scmp.eq.s32.totalorder %s21, 0
      %p63 = por %p61, %p62
      %p64 = scmp.ne.s32.totalorder %s52, %s53
      %p65 = scmp.eq.s32.totalorder %s22, 1
      %p66 = por %p64, %p65
      %p68 = scmp.ne.s32.totalorder %s53, %s67
      %p69 = scmp.eq.s32.totalorder %s22, 0
      %p70 = por %p68, %p69
      %s72 = sadd.s32 %s71, 1
      %p75 = scmp.eq.s32.totalorder %s16, 1
      %p76 = scmp.ne.s32.totalorder %s71, %s73
      %p77 = scmp.eq.s32.totalorder %s16, 0
      %p78 = por %p76, %p77
      %p79 = scmp.ne.s32.totalorder %s71, %s73
      %p80 = scmp.eq.s32.totalorder %s21, 1
      %p81 = por %p79, %p80
      %p82 = scmp.ne.s32.totalorder %s73, %s74
      %p83 = scmp.eq.s32.totalorder %s21, 0
      %p84 = por %p82, %p83
      %p85 = scmp.ne.s32.totalorder %s73, %s74
      %p86 = scmp.eq.s32.totalorder %s22, 1
      %p87 = por %p85, %p86
      %p89 = scmp.ne.s32.totalorder %s74, %s88
      %p90 = scmp.eq.s32.totalorder %s22, 0
      %p91 = por %p89, %p90
      %s92 = ssub.s32 %s16, %s23
      %p93 = scmp.eq.s32.totalorder %s92, 0
      %s95 = sadd.s32 %s94, 1
      %s96 = scalar_select %p93, %s94, %s95
      %p99 = pneg %p93
      %p100 = scmp.eq.s32.totalorder %s16, 1
      %p101 = por %p99, %p100
      %p102 = scmp.ne.s32.totalorder %s94, %s97
      %p103 = scmp.eq.s32.totalorder %s16, 0
      %p104 = por %p102, %p103
      %p105 = scmp.ne.s32.totalorder %s94, %s97
      %p106 = scmp.eq.s32.totalorder %s21, 1
      %p107 = por %p105, %p106
      %p108 = scmp.ne.s32.totalorder %s97, %s98
      %p109 = scmp.eq.s32.totalorder %s21, 0
      %p110 = por %p108, %p109
      %p111 = scmp.ne.s32.totalorder %s97, %s98
      %p112 = scmp.eq.s32.totalorder %s22, 1
      %p113 = por %p111, %p112
      %p115 = scmp.ne.s32.totalorder %s98, %s114
      %p116 = scmp.eq.s32.totalorder %s22, 0
      %p117 = por %p115, %p116
      %p118 = scmp.le.s32.totalorder 1, %s16
      %p119 = scmp.lt.s32.totalorder %s16, 3
      %p120 = pnand %p118, %p119
      %p121 = pneg %p120
      // Predicated region
      $region9: #{tpu_custom_call.1} parent=5 // pred_check
        _
      $region10: #{tpu_custom_call.1} parent=5 // pred_check_branch
        %123 = sbr.rel (%p120) target = $region12
      $region11: #{tpu_custom_call.1} parent=5 // pred_region
        %s124 = ssub.s32 %s16, 1
        // Predicated region
        $region13: #{tpu_custom_call.1} parent=11 // pred_check
          %p125 = pneg %p63
        $region14: #{tpu_custom_call.1} parent=11 // pred_check_branch
          %127 = sbr.rel (%p125) target = $region16
        $region15: #{tpu_custom_call.1} parent=11 // pred_region
          %s129 = ssub.s32 2048, 2048
          %130 = vsyncadd [#allocation6], %s129
          %s131 = sshll.u32 [#allocation5], 4
          %s132 = int_to_ptr.vmem [resolvable:$true] %s131
          %137 = dma.hbm_to_vmem [thread:$0]  %s1, 2048, %s132, [#allocation6], 128, 128, 8
        $region16: #{tpu_custom_call.1} parent=11 // pred_fallthru
          _
        // Predicated region
        $region17: #{tpu_custom_call.1} parent=11 // pred_check
          %p138 = pneg %p84
        $region18: #{tpu_custom_call.1} parent=11 // pred_check_branch
          %140 = sbr.rel (%p138) target = $region20
        $region19: #{tpu_custom_call.1} parent=11 // pred_region
          _
        $region20: #{tpu_custom_call.1} parent=11 // pred_fallthru
          _
      $region12: #{tpu_custom_call.1} parent=5 // pred_fallthru
        _
      %p141 = scmp.lt.s32.totalorder %s16, 2
      // Predicated region
      $region21: #{tpu_custom_call.1} parent=5 // pred_check
        %p142 = pneg %p141
      $region22: #{tpu_custom_call.1} parent=5 // pred_check_branch
        %144 = sbr.rel (%p142) target = $region24
      $region23: #{tpu_custom_call.1} parent=5 // pred_region
        // Predicated region
        $region25: #{tpu_custom_call.1} parent=23 // pred_check
          %p145 = pneg %p36
        $region26: #{tpu_custom_call.1} parent=23 // pred_check_branch
          %147 = sbr.rel (%p145) target = $region28
        $region27: #{tpu_custom_call.1} parent=23 // pred_region
          %s148 = sand.u32 %s26, 1
          %s149 = scalar_lea.sflag [#allocation3], %s148
          %s150 = sand.u32 %s26, 1
          %s151 = smul.addr %s150, 8
          %s152 = scalar_lea.vmem [#allocation2], %s151
          %s154 = ssub.s32 128, 128
          %155 = vsyncadd %s149, %s154
          %s156 = smul.addr %s16, 128
          %s157 = scalar_lea.hbm %s0, %s156
          %s159 = sshll.u32 %s152, 4
          %s160 = int_to_ptr.vmem [resolvable:$true] %s159
          %162 = dma.hbm_to_vmem [thread:$0]  %s157, 128, %s160, %s149
        $region28: #{tpu_custom_call.1} parent=23 // pred_fallthru
          _
      $region24: #{tpu_custom_call.1} parent=5 // pred_fallthru
        _
      %p163 = scmp.le.s32.totalorder 1, %s16
      %p164 = scmp.lt.s32.totalorder %s16, 3
      %p165 = pnand %p163, %p164
      %p166 = pneg %p165
      // Predicated region
      $region29: #{tpu_custom_call.1} parent=5 // pred_check
        _
      $region30: #{tpu_custom_call.1} parent=5 // pred_check_branch
        %168 = sbr.rel (%p165) target = $region32
      $region31: #{tpu_custom_call.1} parent=5 // pred_region
        %s169 = ssub.s32 %s16, 1
        %s170 = sand.u32 %s29, 1
        %s171 = scalar_lea.sflag [#allocation3], %s170
        %s172 = sand.u32 %s29, 1
        %s173 = smul.addr %s172, 8
        %s174 = scalar_lea.vmem [#allocation2], %s173
        // Predicated region
        $region33: #{tpu_custom_call.1} parent=31 // pred_check
          %p175 = pneg %p42
        $region34: #{tpu_custom_call.1} parent=31 // pred_check_branch
          %177 = sbr.rel (%p175) target = $region36
        $region35: #{tpu_custom_call.1} parent=31 // pred_region
          %178 = dma.done %s171, 128
        $region36: #{tpu_custom_call.1} parent=31 // pred_fallthru
          _
        // Predicated region
        $region37: #{tpu_custom_call.1} parent=31 // pred_check
          %p179 = pneg %p63
        $region38: #{tpu_custom_call.1} parent=31 // pred_check_branch
          %181 = sbr.rel (%p179) target = $region40
        $region39: #{tpu_custom_call.1} parent=31 // pred_region
          %182 = dma.done [#allocation6], 2048
        $region40: #{tpu_custom_call.1} parent=31 // pred_fallthru
          _
        %s183 = sand.u32 %s29, 1
        %s184 = scalar_lea.sflag [#allocation3], %s183
        %s185 = sand.u32 %s29, 1
        %s186 = smul.addr %s185, 8
        %s187 = scalar_lea.vmem [#allocation2], %s186
        %p188 = pneg %p42
        %p189 = pneg %p39
        %p190 = pneg %p63
        %p191 = pneg %p60
        %p192 = pneg %p84
        %p193 = pneg %p81
        %p194 = pneg %p110
        %p195 = pneg %p107
        %s196 = sand.u32 %s97, 1
        %s197 = scalar_lea.sflag [#allocation4], %s196
        %s198 = sand.u32 %s97, 1
        %s199 = smul.addr %s198, 8
        %s200 = scalar_lea.vmem [#allocation7], %s199
        %v201 = vld [vmem:[%s174] sm:$0xff]
        %202 = vadd.xlane.f32.xlu0 %v201
        %v203 = vpop.xlane.xlu0 %202
        %v204 = vrcp.pop 128.0
        %v205 = vmul.f32 %v203, %v204
        %v206 = vsub.f32 %v201, %v205
        %v207 = vmul.f32 %v206, %v206
        %208 = vadd.xlane.f32.xlu0 %v207
        %v209 = vpop.xlane.xlu0 %208
        %v210 = vrcp.pop 127.0
        %v211 = vmul.f32 %v209, %v210
        %v212 = vrsqrt.pop %v211
        %v213 = vmul.f32 %v211, %v212
        %vm214 = vcmp.eq.f32.partialorder %v211, inf
        %v215 = vsel %vm214, %v211, %v213
        %vm216 = vcmp.eq.f32.partialorder %v211, 0.0
        %v217 = vand.u32 %v211, 2147483648
        %v218 = vsel %vm216, %v217, %v215
        %v219 = vadd.f32 %v218, 1e-06
        %v220 = vrcp.pop %v219
        %v221 = vmul.f32 %v206, %v220
        %v222 = vld [vmem:[#allocation5] sm:$0xff]
        %v223 = vld [vmem:[#allocation5 + $0x8] sm:$0xff]
        %v224 = vld [vmem:[#allocation5 + $0x10] sm:$0xff]
        %v225 = vld [vmem:[#allocation5 + $0x18] sm:$0xff]
        %v226 = vld [vmem:[#allocation5 + $0x20] sm:$0xff]
        %v227 = vld [vmem:[#allocation5 + $0x28] sm:$0xff]
        %v228 = vld [vmem:[#allocation5 + $0x30] sm:$0xff]
        %v229 = vld [vmem:[#allocation5 + $0x38] sm:$0xff]
        %v230 = vld [vmem:[#allocation5 + $0x40] sm:$0xff]
        %v231 = vld [vmem:[#allocation5 + $0x48] sm:$0xff]
        %v232 = vld [vmem:[#allocation5 + $0x50] sm:$0xff]
        %v233 = vld [vmem:[#allocation5 + $0x58] sm:$0xff]
        %v234 = vld [vmem:[#allocation5 + $0x60] sm:$0xff]
        %v235 = vld [vmem:[#allocation5 + $0x68] sm:$0xff]
        %v236 = vld [vmem:[#allocation5 + $0x70] sm:$0xff]
        %v237 = vld [vmem:[#allocation5 + $0x78] sm:$0xff]
        %v238 = vld [vmem:[%s2] sm:$0x1]
        %v240 = vlaneseq
        %v241 = vshrl.u32 %v240, 7
        %v242 = vsub.s32 0, %v241
        %v243 = vrot.slane %v238, %v242
        %245 = vmatprep.subr.mxu0 0.0
        %246 = vmatpush1.msra.mxu0 %v222
        %247 = vmatprep.subr.mxu0 0.0
        %248 = vmatpush1.msra.mxu0 %v223
        %249 = vmatprep.subr.mxu0 0.0
        %250 = vmatpush1.msra.mxu0 %v224
        %251 = vmatprep.subr.mxu0 0.0
        %252 = vmatpush1.msra.mxu0 %v225
        %253 = vmatprep.subr.mxu0 0.0
        %254 = vmatpush1.msra.mxu0 %v226
        %255 = vmatprep.subr.mxu0 0.0
        %256 = vmatpush1.msra.mxu0 %v227
        %257 = vmatprep.subr.mxu0 0.0
        %258 = vmatpush1.msra.mxu0 %v228
        %259 = vmatprep.subr.mxu0 0.0
        %260 = vmatpush1.msra.mxu0 %v229
        %261 = vmatprep.subr.mxu0 0.0
        %262 = vmatpush1.msra.mxu0 %v230
        %263 = vmatprep.subr.mxu0 0.0
        %264 = vmatpush1.msra.mxu0 %v231
        %265 = vmatprep.subr.mxu0 0.0
        %266 = vmatpush1.msra.mxu0 %v232
        %267 = vmatprep.subr.mxu0 0.0
        %268 = vmatpush1.msra.mxu0 %v233
        %269 = vmatprep.subr.mxu0 0.0
        %270 = vmatpush1.msra.mxu0 %v234
        %271 = vmatprep.subr.mxu0 0.0
        %272 = vmatpush1.msra.mxu0 %v235
        %273 = vmatprep.subr.mxu0 0.0
        %274 = vmatpush1.msra.mxu0 %v236
        %275 = vmatprep.subr.mxu0 0.0
        %276 = vmatpush1.msra.mxu0 %v237
        %277 = vmatprep.subr.mxu0 0.0
        %278 = vmatpush1.msra.mxu0 0.0
        %279 = vmatprep.subr.mxu0 0.0
        %280 = vmatpush1.msra.mxu0 0.0
        %281 = vmatprep.subr.mxu0 0.0
        %282 = vmatpush1.msra.mxu0 0.0
        %283 = vmatprep.subr.mxu0 0.0
        %284 = vmatpush1.msra.mxu0 0.0
        %285 = vmatprep.subr.mxu0 0.0
        %286 = vmatpush1.msra.mxu0 0.0
        %287 = vmatprep.subr.mxu0 0.0
        %288 = vmatpush1.msra.mxu0 0.0
        %289 = vmatprep.subr.mxu0 0.0
        %290 = vmatpush1.msra.mxu0 0.0
        %291 = vmatprep.subr.mxu0 0.0
        %292 = vmatpush1.msra.mxu0 0.0
        %293 = vmatprep.subr.mxu0 0.0
        %294 = vmatpush1.msra.mxu0 0.0
        %295 = vmatprep.subr.mxu0 0.0
        %296 = vmatpush1.msra.mxu0 0.0
        %297 = vmatprep.subr.mxu0 0.0
        %298 = vmatpush1.msra.mxu0 0.0
        %299 = vmatprep.subr.mxu0 0.0
        %300 = vmatpush1.msra.mxu0 0.0
        %301 = vmatprep.subr.mxu0 0.0
        %302 = vmatpush1.msra.mxu0 0.0
        %303 = vmatprep.subr.mxu0 0.0
        %304 = vmatpush1.msra.mxu0 0.0
        %305 = vmatprep.subr.mxu0 0.0
        %306 = vmatpush1.msra.mxu0 0.0
        %307 = vmatprep.subr.mxu0 0.0
        %308 = vmatpush1.msra.mxu0 0.0
        %309 = vmatprep.mubr.f32.mxu0 0.0
        %310 = vmatmul.mubr.f32.gmra.mrb[0].mxu0 %v221
        %v311 = vpop.f32.mrb[0].mxu0
        %v312 = vadd.f32 %v243, %v311
        %v313 = vpop.f32.mrb[0].mxu0
        %314 = vdwg.mxu0
        %v315 = vadd.f32 %v201, %v312
        %316 = vst [vmem:[%s200] sm:$0xff] %v315
        %s317 = sand.u32 %s97, 1
        %s318 = scalar_lea.sflag [#allocation4], %s317
        %s319 = sand.u32 %s97, 1
        %s320 = smul.addr %s319, 8
        %s321 = scalar_lea.vmem [#allocation7], %s320
        // Predicated region
        $region41: #{tpu_custom_call.1} parent=31 // pred_check
          %p322 = pneg %p107
        $region42: #{tpu_custom_call.1} parent=31 // pred_check_branch
          %324 = sbr.rel (%p322) target = $region44
        $region43: #{tpu_custom_call.1} parent=31 // pred_region
          %s326 = ssub.s32 128, 128
          %327 = vsyncadd %s318, %s326
          %s328 = smul.addr %s21, 128
          %s329 = scalar_lea.hbm %s3, %s328
          %s331 = sshll.u32 %s321, 4
          %s332 = int_to_ptr.vmem [resolvable:$true] %s331
          %334 = dma.vmem_to_hbm [thread:$0]  %s332, 128, %s329, %s318
        $region44: #{tpu_custom_call.1} parent=31 // pred_fallthru
          _
      $region32: #{tpu_custom_call.1} parent=5 // pred_fallthru
        _
      %p335 = scmp.le.s32.totalorder 2, %s16
      // Predicated region
      $region45: #{tpu_custom_call.1} parent=5 // pred_check
        %p336 = pneg %p335
      $region46: #{tpu_custom_call.1} parent=5 // pred_check_branch
        %338 = sbr.rel (%p336) target = $region48
      $region47: #{tpu_custom_call.1} parent=5 // pred_region
        %s339 = ssub.s32 %s16, 2
        // Predicated region
        $region49: #{tpu_custom_call.1} parent=47 // pred_check
          %p340 = pneg %p113
        $region50: #{tpu_custom_call.1} parent=47 // pred_check_branch
          %342 = sbr.rel (%p340) target = $region52
        $region51: #{tpu_custom_call.1} parent=47 // pred_region
          %s343 = sand.u32 %s98, 1
          %s344 = scalar_lea.sflag [#allocation4], %s343
          %s345 = sand.u32 %s98, 1
          %s346 = smul.addr %s345, 8
          %s347 = scalar_lea.vmem [#allocation7], %s346
          %348 = dma.done %s344, 128
        $region52: #{tpu_custom_call.1} parent=47 // pred_fallthru
          _
      $region48: #{tpu_custom_call.1} parent=5 // pred_fallthru
        _
    $region6: #{tpu_custom_call.1} parent=1 // loop_footer
      %s20 = sadd.s32 1, %s16
    $region7: #{tpu_custom_call.1} parent=1 // loop_footer_branch
      %15 = sbr.rel target = $region3
    $region8: #{tpu_custom_call.1} parent=1 // loop_exit
      _
    %349 = vsyncpa [#allocation3], 1
    %s350 = scalar_lea.sflag [#allocation3], 1
    %351 = vsyncpa %s350, 1
    %352 = vsyncpa [#allocation6], 1
    %353 = vsyncpa [#allocation4], 1
    %s354 = scalar_lea.sflag [#allocation4], 1
    %355 = vsyncpa %s354, 1

</llo_original>
